<compile_context>
chip_gen: v5e
topology: v5e:2x2
jax: 0.10.0
libtpu: 0.0.40
codegen_flags: <defaults>
</compile_context>

<pallas_src>
import functools

import jax
import jax.numpy as jnp
from jax import lax
from jax.experimental import pallas as pl
from jax.experimental.pallas import tpu as pltpu


# ------------------------------ Kendall (vector path) ------------------------------
@functools.lru_cache(maxsize=None)
def _kendall_call(num_tasks):
    """total = sum_t (exp(-log_sigma[t]) * loss[t] + log_sigma[t])."""

    def kernel(loss_ref, ls_ref, out_ref):
        loss = loss_ref[...]                      # (1, num_tasks) f32
        ls = ls_ref[...]                          # (1, num_tasks) f32
        # get_precisions = exp(-log_sigma); EUP handles exp, VPU the rest.
        contrib = jnp.exp(-ls) * loss + ls
        # Full-extent (1, num_tasks) block -> Mosaic masks tile padding in the
        # cross-lane reduce, so no explicit lane mask is required.
        out_ref[...] = jnp.sum(contrib, axis=(0, 1), keepdims=True)

    return pl.pallas_call(
        kernel,
        out_shape=jax.ShapeDtypeStruct((1, 1), jnp.float32),
        in_specs=[pl.BlockSpec(memory_space=pltpu.MemorySpace.VMEM),
                  pl.BlockSpec(memory_space=pltpu.MemorySpace.VMEM)],
        out_specs=pl.BlockSpec(memory_space=pltpu.MemorySpace.VMEM),
    )


# ---------------------------- traditional (scalar path) ----------------------------
@functools.lru_cache(maxsize=None)
def _traditional_call(num_tasks):
    """total = (1 - sum(log_sigma)) * loss[0] + sum_{t>=1} log_sigma[t-1] * loss[t].

    Pure scalar-unit kernel: SMEM inputs, scalar fori_loop, SMEM scalar output.
    No VMEM DMA, no mask, no cross-lane reduction.
    """
    n_sig = num_tasks - 1

    def kernel(loss_ref, ls_ref, out_ref):
        # loss_ref: (num_tasks,) f32 SMEM ; ls_ref: (num_tasks-1,) f32 SMEM.
        def body(t, carry):
            sig_sum, acc = carry
            s = ls_ref[t]
            return sig_sum + s, acc + s * loss_ref[t + 1]

        sig_sum, acc = lax.fori_loop(
            0, n_sig, body,
            (jnp.float32(0.0), jnp.float32(0.0)),
            unroll=True)
        out_ref[0] = (1.0 - sig_sum) * loss_ref[0] + acc

    return pl.pallas_call(
        kernel,
        out_shape=jax.ShapeDtypeStruct((1,), jnp.float32),
        in_specs=[pl.BlockSpec(memory_space=pltpu.MemorySpace.SMEM),
                  pl.BlockSpec(memory_space=pltpu.MemorySpace.SMEM)],
        out_specs=pl.BlockSpec(memory_space=pltpu.MemorySpace.SMEM),
    )


# ------------------------------------ wrapper ------------------------------------
def task_weights_forward(loss_terms, log_sigma, num_tasks=2, traditional=False):
    """JAX/Pallas equivalent of task_weights.forward(loss_terms, log_sigma)."""
    loss_terms = jnp.asarray(loss_terms, jnp.float32)
    log_sigma = jnp.asarray(log_sigma, jnp.float32)

    assert num_tasks <= 128, "task counts beyond one 128-lane vreg are unsupported"
    assert loss_terms.shape[0] >= num_tasks, "need one loss term per task"

    if traditional:
        assert num_tasks >= 2, "traditional weighting needs at least 2 tasks"
        assert log_sigma.shape[0] == num_tasks - 1, (
            "traditional weighting expects len(log_sigma) == num_tasks - 1")
        out = _traditional_call(num_tasks)(loss_terms[:num_tasks], log_sigma)
        return out[0]

    assert log_sigma.shape[0] == num_tasks, (
        "Kendall weighting expects len(log_sigma) == num_tasks")
    out = _kendall_call(num_tasks)(
        loss_terms[:num_tasks].reshape(1, num_tasks),
        log_sigma.reshape(1, num_tasks))
    return out[0, 0]


# ------------------------------ reference (pure JAX) ------------------------------
def _reference(loss_terms, log_sigma, num_tasks, traditional):
    loss_terms = jnp.asarray(loss_terms, jnp.float32)
    log_sigma = jnp.asarray(log_sigma, jnp.float32)
    if traditional:
        total = (1.0 - jnp.sum(log_sigma)) * loss_terms[0]
        for t in range(1, num_tasks):
            total = total + log_sigma[t - 1] * loss_terms[t]
        return total
    prec = 1.0 / jnp.exp(log_sigma)
    total = 0.0
    for t in range(num_tasks):
        total = total + prec[t] * loss_terms[t] + log_sigma[t]
    return total


if __name__ == "__main__":
    num_tasks = 2
    key = jax.random.PRNGKey(0)
    # Example per-task losses (e.g. Energy loss, Force loss).
    loss_terms = jax.random.uniform(key, (num_tasks,), jnp.float32, 0.1, 5.0)

    # Deterministic parameter init, mirroring __init__:
    log_sigma_kendall = jnp.zeros((num_tasks,), jnp.float32)                  # non-traditional
    log_sigma_trad = jnp.ones((num_tasks - 1,), jnp.float32) / num_tasks      # traditional

    ok = True

    # Kendall / Gal / Cipolla uncertainty weighting (vector/EUP path).
    out_k = task_weights_forward(loss_terms, log_sigma_kendall,
                                 num_tasks=num_tasks, traditional=False)
    out_k = jax.block_until_ready(out_k)
    ref_k = _reference(loss_terms, log_sigma_kendall, num_tasks, False)
    ok &= bool(jnp.allclose(out_k, ref_k, rtol=1e-5, atol=1e-5))

    # Traditional fixed weighting: (1 - a) * E_loss + a * F_loss (scalar/SMEM path).
    out_t = task_weights_forward(loss_terms, log_sigma_trad,
                                 num_tasks=num_tasks, traditional=True)
    out_t = jax.block_until_ready(out_t)
    ref_t = _reference(loss_terms, log_sigma_trad, num_tasks, True)
    ok &= bool(jnp.allclose(out_t, ref_t, rtol=1e-5, atol=1e-5))

    # Second call exercises the lru_cache'd pallas_call callables (no rebuild).
    out_k2 = jax.block_until_ready(
        task_weights_forward(loss_terms, log_sigma_kendall,
                             num_tasks=num_tasks, traditional=False))
    ok &= bool(jnp.allclose(out_k2, ref_k, rtol=1e-5, atol=1e-5))

    if ok:
        print("KERNEL_OK")
    else:
        raise SystemExit("mismatch vs reference")
</pallas_src>

<mosaic_0001>
module attributes {stable_mosaic.version = 11 : i64} {
  func.func @kernel(%arg0: memref<1x2xf32, #tpu.memory_space<vmem>>, %arg1: memref<1x2xf32, #tpu.memory_space<vmem>>, %arg2: memref<1x1xf32, #tpu.memory_space<vmem>>) attributes {dimension_semantics = [], scalar_prefetch = 0 : i64, scratch_operands = 0 : i64, tpu.core_type = #tpu.core_type<tc>} {
    %c0 = arith.constant 0 : index
    %c0_0 = arith.constant 0 : index
    %0 = vector.load %arg0[%c0, %c0_0] : memref<1x2xf32, #tpu.memory_space<vmem>>, vector<1x2xf32>
    %c0_1 = arith.constant 0 : index
    %c0_2 = arith.constant 0 : index
    %1 = vector.load %arg1[%c0_1, %c0_2] : memref<1x2xf32, #tpu.memory_space<vmem>>, vector<1x2xf32>
    %cst = arith.constant 0.000000e+00 : f32
    %2 = vector.broadcast %cst : f32 to vector<1x2xf32>
    %3 = arith.subf %2, %1 : vector<1x2xf32>
    %4 = math.exp %3 : vector<1x2xf32>
    %5 = arith.mulf %4, %0 : vector<1x2xf32>
    %6 = arith.addf %5, %1 : vector<1x2xf32>
    %7 = vector.shape_cast %6 : vector<1x2xf32> to vector<1x1x2xf32>
    %cst_3 = arith.constant dense<0.000000e+00> : vector<1xf32>
    %8 = vector.multi_reduction <add>, %7, %cst_3 [1, 2] : vector<1x1x2xf32> to vector<1xf32>
    %9 = vector.shape_cast %8 : vector<1xf32> to vector<1x1x1xf32>
    %10 = vector.extract %9[0, 0, 0] : f32 from vector<1x1x1xf32>
    %11 = vector.broadcast %10 : f32 to vector<1x1xf32>
    %c0_4 = arith.constant 0 : index
    %c0_5 = arith.constant 0 : index
    %12 = vector.load %arg2[%c0_4, %c0_5] : memref<1x1xf32, #tpu.memory_space<vmem>>, vector<1x1xf32>
    tpu.vector_store %arg2[%c0_4, %c0_5], %11 {strides = array<i32>} : memref<1x1xf32, #tpu.memory_space<vmem>>, vector<1x1xf32>,
    return
  }
}

</mosaic_0001>

<llo_original>
// kernel: tpu_custom_call.1
$region0: #{tpu_custom_call.1}
  #allocation0 [shape = 'u32[]', space=smem, size = 0x4, offset = 0x4, fixed_abs, tag = 'smem constant byte address 0x4 - core index']
  #allocation1 [shape = 'u32[72,128]{1,0:T(1,128)}', space=vmem, size = 0x9000, scoped, tag = 'internal scratch']
  %s0 = inlined_call_operand.hbm [shape: f32[1,2], index: 0, kind: input, shape index: {}]
  %s1 = inlined_call_operand.hbm [shape: f32[1,2], index: 1, kind: input, shape index: {}]
  %s2 = inlined_call_operand.hbm [shape: f32[1,1], index: 2, kind: output, shape index: {}]
  %s3 = sld [smem:[#allocation0]]
  $region26: #{tpu_custom_call.1} parent=0
    _
  %s5 = ssub.s32 1, %s3
  %s6 = scalar_select 0, %s5, %s3
  $region1: #{tpu_custom_call.1} parent=0
    #allocation2 [shape = 'u8[512]{0}', space=vmem, size = 0x400, scoped, tag = 'input window, operand 0, single buffered']
    #allocation3 [shape = 's32[1]{0}', space=sflag, size = 0x4, scoped, tag = 'scoped memory for tpu_custom_call.1']
    #allocation4 [shape = 's32[1]{0}', space=sflag, size = 0x4, scoped, tag = 'scoped memory for tpu_custom_call.1']
    #allocation5 [shape = 'u8[512]{0}', space=vmem, size = 0x400, scoped, tag = 'input window, operand 1, single buffered']
    #allocation6 [shape = 's32[1]{0}', space=sflag, size = 0x4, scoped, tag = 'scoped memory for tpu_custom_call.1']
    #allocation7 [shape = 'u8[512]{0}', space=vmem, size = 0x400, scoped, tag = 'output window, operand 0, single buffered']
    %7 = vsyncpa [#allocation3], 0
    %8 = vsyncpa [#allocation6], 0
    %9 = vsyncpa [#allocation4], 0
    // Predicated region
    $region2: #{tpu_custom_call.1} parent=1 // pred_check
      _
    $region3: #{tpu_custom_call.1} parent=1 // pred_check_branch
      %11 = sbr.rel (0) target = $region5
    $region4: #{tpu_custom_call.1} parent=1 // pred_region
      %13 = vsyncadd [#allocation3], 0
      %s15 = sshll.u32 %s0, 4
      %s16 = int_to_ptr.hbm [resolvable:$true] %s15
      %s17 = sshll.u32 [#allocation2], 4
      %s18 = int_to_ptr.vmem [resolvable:$true] %s17
      %20 = dma.hbm_to_vmem [thread:$0]  %s16, 16, %s18, [#allocation3]
    $region5: #{tpu_custom_call.1} parent=1 // pred_fallthru
      _
    // Predicated region
    $region6: #{tpu_custom_call.1} parent=1 // pred_check
      _
    $region7: #{tpu_custom_call.1} parent=1 // pred_check_branch
      %22 = sbr.rel (0) target = $region9
    $region8: #{tpu_custom_call.1} parent=1 // pred_region
      %24 = vsyncadd [#allocation6], 0
      %s26 = sshll.u32 %s1, 4
      %s27 = int_to_ptr.hbm [resolvable:$true] %s26
      %s28 = sshll.u32 [#allocation5], 4
      %s29 = int_to_ptr.vmem [resolvable:$true] %s28
      %31 = dma.hbm_to_vmem [thread:$0]  %s27, 16, %s29, [#allocation6]
    $region9: #{tpu_custom_call.1} parent=1 // pred_fallthru
      _
    // Predicated region
    $region10: #{tpu_custom_call.1} parent=1 // pred_check
      _
    $region11: #{tpu_custom_call.1} parent=1 // pred_check_branch
      %33 = sbr.rel (0) target = $region13
    $region12: #{tpu_custom_call.1} parent=1 // pred_region
      %35 = dma.done [#allocation3], 16
    $region13: #{tpu_custom_call.1} parent=1 // pred_fallthru
      _
    // Predicated region
    $region14: #{tpu_custom_call.1} parent=1 // pred_check
      _
    $region15: #{tpu_custom_call.1} parent=1 // pred_check_branch
      %37 = sbr.rel (0) target = $region17
    $region16: #{tpu_custom_call.1} parent=1 // pred_region
      %39 = dma.done [#allocation6], 16
    $region17: #{tpu_custom_call.1} parent=1 // pred_fallthru
      _
    %v40 = vld [vmem:[#allocation2] sm:$0x1]
    %v41 = vld [vmem:[#allocation5] sm:$0x1]
    %v42 = vsub.f32 0.0, %v41
    %v43 = vmul.f32 %v42, 1.442695
    %v44 = vpow.pop %v43
    %v45 = vmul.f32 %v44, %v40
    %v46 = vadd.f32 %v45, %v41
    %vm47 = vcmask 8192
    %v48 = vsel %vm47, %v46, 0.0
    %49 = vadd.xlane.f32.xlu0 %v48
    %v50 = vpop.xlane.xlu0 %49
    %v51 = vrot.slane %v50, 4
    %v52 = vadd.f32 %v50, %v51
    %v53 = vrot.slane %v52, 2
    %v54 = vadd.f32 %v52, %v53
    %v55 = vrot.slane %v54, 1
    %v56 = vadd.f32 %v54, %v55
    %s57 = vtos %v56
    %v58 = vstv %s57
    %vm59 = vcmask 0
    %60 = vst.msk [vmem:[#allocation7] sm:$0x1] %vm59, %v58
    // Predicated region
    $region18: #{tpu_custom_call.1} parent=1 // pred_check
      _
    $region19: #{tpu_custom_call.1} parent=1 // pred_check_branch
      %62 = sbr.rel (0) target = $region21
    $region20: #{tpu_custom_call.1} parent=1 // pred_region
      %64 = vsyncadd [#allocation4], 0
      %s66 = sshll.u32 [#allocation7], 4
      %s67 = int_to_ptr.vmem [resolvable:$true] %s66
      %s68 = sshll.u32 %s2, 4
      %s69 = int_to_ptr.hbm [resolvable:$true] %s68
      %71 = dma.vmem_to_hbm [thread:$0]  %s67, 16, %s69, [#allocation4]
    $region21: #{tpu_custom_call.1} parent=1 // pred_fallthru
      _
    // Predicated region
    $region22: #{tpu_custom_call.1} parent=1 // pred_check
      _
    $region23: #{tpu_custom_call.1} parent=1 // pred_check_branch
      %73 = sbr.rel (0) target = $region25
    $region24: #{tpu_custom_call.1} parent=1 // pred_region
      %75 = dma.done [#allocation4], 16
    $region25: #{tpu_custom_call.1} parent=1 // pred_fallthru
      _
    %76 = vsyncpa [#allocation3], 1
    %77 = vsyncpa [#allocation6], 1
    %78 = vsyncpa [#allocation4], 1

</llo_original>
